<compile_context>
chip_gen: v7x
topology: tpu7x:2x2x1
jax: 0.10.0
libtpu: 0.0.40
codegen_flags: <defaults>
</compile_context>

<pallas_src>
import functools

import jax
import jax.numpy as jnp
from jax.experimental import pallas as pl
from jax.experimental.pallas import tpu as pltpu


def _round_up(v, m):
    return ((v + m - 1) // m) * m


def _fused_gcn_kernel(a_ref, x_ref, w1_ref, b1_ref, w2_ref, b2_ref, o_ref, *,
                      num_class, l1_aggregate_first, l2_project_first):
    """softmax(A @ relu(A @ X @ W1 + b1) @ W2 + b2); whole problem resident in VMEM."""
    a = a_ref[...]                                                      # bf16 (Np, Np)

    # ---- layer 1: put the narrower of (fi_pad, fh_pad) on the N^2 aggregation GEMM.
    if l1_aggregate_first:                       # (A @ X) @ W1 : N^2 GEMM width = fi_pad
        ax = jnp.dot(a, x_ref[...], preferred_element_type=jnp.float32)
        h1 = jnp.dot(ax.astype(jnp.bfloat16), w1_ref[...],
                     preferred_element_type=jnp.float32) + b1_ref[...]
    else:                                        # A @ (X @ W1) : N^2 GEMM width = fh_pad
        xw = jnp.dot(x_ref[...], w1_ref[...], preferred_element_type=jnp.float32)
        h1 = jnp.dot(a, xw.astype(jnp.bfloat16),
                     preferred_element_type=jnp.float32) + b1_ref[...]
    h1 = jnp.maximum(h1, 0.0)                                           # ReLU, f32

    # ---- layer 2: put the narrower of (fh_pad, c_pad) on the N^2 aggregation GEMM.
    if l2_project_first:                         # A @ (H @ W2) : N^2 GEMM width = c_pad
        hw = jnp.dot(h1.astype(jnp.bfloat16), w2_ref[...],
                     preferred_element_type=jnp.float32)
        h2 = jnp.dot(a, hw.astype(jnp.bfloat16),
                     preferred_element_type=jnp.float32) + b2_ref[...]
    else:                                        # (A @ H) @ W2 : N^2 GEMM width = fh_pad
        ah = jnp.dot(a, h1.astype(jnp.bfloat16), preferred_element_type=jnp.float32)
        h2 = jnp.dot(ah.astype(jnp.bfloat16), w2_ref[...],
                     preferred_element_type=jnp.float32) + b2_ref[...]

    # ---- row-wise softmax over the real classes only (padded lanes masked out).
    col = jax.lax.broadcasted_iota(jnp.int32, h2.shape, 1)
    h2 = jnp.where(col < num_class, h2, jnp.float32(-1e30))
    m = jnp.max(h2, axis=1, keepdims=True)
    e = jnp.exp(h2 - m)                                  # padded lanes underflow to 0
    s = jnp.sum(e, axis=1, keepdims=True)
    inv = pl.reciprocal(s, approx=True)                  # EUP slot, off the VPU path
    inv = inv * (2.0 - s * inv)                          # one Newton step -> ~f32 precision
    o_ref[...] = (e * inv).astype(o_ref.dtype)


def _pad2(x, rows, cols):
    return jnp.pad(x, ((0, rows - x.shape[0]), (0, cols - x.shape[1])))


def gcn_fused(a_norm_padded, x, w1, b1, w2, b2):
    """Both GCN layers in one pallas_call; whole-resident, single-buffered VMEM blocks."""
    n, f_in = x.shape
    f_hid = w1.shape[1]
    n_cls = w2.shape[1]

    n_pad = a_norm_padded.shape[0]
    fi_pad = _round_up(f_in, 128)
    fh_pad = _round_up(f_hid, 128)
    c_pad = _round_up(n_cls, 128)

    x_p = _pad2(x, n_pad, fi_pad).astype(jnp.bfloat16)
    w1_p = _pad2(w1, fi_pad, fh_pad).astype(jnp.bfloat16)
    w2_p = _pad2(w2, fh_pad, c_pad).astype(jnp.bfloat16)
    b1_p = _pad2(b1.reshape(1, -1), 1, fh_pad).astype(jnp.float32)
    b2_p = _pad2(b2.reshape(1, -1), 1, c_pad).astype(jnp.float32)

    # Scoped-VMEM budget: operands + output + a few f32 intermediates, 2x headroom.
    # Never drop below 32 MiB (the largest default) so small problems stay safe.
    bytes_in = (a_norm_padded.size * 2 + x_p.size * 2 + w1_p.size * 2 + w2_p.size * 2
                + b1_p.size * 4 + b2_p.size * 4)
    bytes_out = n_pad * c_pad * 4
    bytes_tmp = 8 * n_pad * max(fi_pad, fh_pad, c_pad) * 4
    vmem_limit = int(min(max(2 * (bytes_in + bytes_out + bytes_tmp) + (2 << 20),
                             32 << 20), 100 << 20))

    kernel = functools.partial(
        _fused_gcn_kernel,
        num_class=n_cls,
        l1_aggregate_first=(fi_pad <= fh_pad),
        l2_project_first=(c_pad <= fh_pad),
    )
    vmem_spec = pl.BlockSpec(memory_space=pltpu.MemorySpace.VMEM)
    out = pl.pallas_call(
        kernel,
        out_shape=jax.ShapeDtypeStruct((n_pad, c_pad), jnp.float32),
        # No grid -> no pipeline -> single-buffered whole-array VMEM refs
        # (same effect as Buffered(1) on every spec, without the pipeline machinery).
        in_specs=[vmem_spec] * 6,
        out_specs=vmem_spec,
        compiler_params=pltpu.CompilerParams(vmem_limit_bytes=vmem_limit),
    )(a_norm_padded, x_p, w1_p, b1_p, w2_p, b2_p)
    return out[:n, :n_cls]


def build_norm_adj_padded(edge_index, num_nodes, n_pad):
    """D^{-1/2}(A+I)D^{-1/2} built directly into the (n_pad, n_pad) bf16 buffer.

    Matches PyG gcn_norm with add_self_loops=True; scaling + cast fused into one
    producer so the wrapper does not do a separate f32 build -> pad -> cast pass.
    """
    src = edge_index[0]
    dst = edge_index[1]
    a = jnp.zeros((n_pad, n_pad), jnp.float32)
    a = a.at[dst, src].add(1.0)                          # A[dst, src] += 1 per edge
    ids = jnp.arange(num_nodes)
    a = a.at[ids, ids].add(1.0)                          # self loops on real nodes only
    deg = jnp.sum(a, axis=1)                             # padded cols are 0 -> real degree
    d_inv_sqrt = jnp.where(deg > 0, jax.lax.rsqrt(deg), 0.0)   # padded rows -> 0
    return (a * d_inv_sqrt[:, None] * d_inv_sqrt[None, :]).astype(jnp.bfloat16)


@jax.jit
def gcn_net_forward(x, edge_index, params):
    """Forward pass of GCNNet: conv1 -> relu -> conv2 -> softmax(dim=1)."""
    n = x.shape[0]
    n_pad = _round_up(n, 128)
    a_norm = build_norm_adj_padded(edge_index, n, n_pad)          # glue (plain JAX)
    return gcn_fused(a_norm, x, params["w1"], params["b1"], params["w2"], params["b2"])


def init_params(key, input_feature, hidden, num_class):
    k1, k2 = jax.random.split(key)
    s1 = (6.0 / (input_feature + hidden)) ** 0.5
    s2 = (6.0 / (hidden + num_class)) ** 0.5
    return {
        "w1": jax.random.uniform(k1, (input_feature, hidden), jnp.float32, -s1, s1),
        "b1": jnp.zeros((hidden,), jnp.float32),
        "w2": jax.random.uniform(k2, (hidden, num_class), jnp.float32, -s2, s2),
        "b2": jnp.zeros((num_class,), jnp.float32),
    }


if __name__ == "__main__":
    key = jax.random.PRNGKey(0)
    k_x, k_e, k_p = jax.random.split(key, 3)

    num_nodes = 64
    input_feature = 16
    hidden = 32          # GCNConv(input_feature, 32)
    num_class = 8
    num_edges = 256

    x = jax.random.normal(k_x, (num_nodes, input_feature), jnp.float32)
    edge_index = jax.random.randint(k_e, (2, num_edges), 0, num_nodes, jnp.int32)

    params = init_params(k_p, input_feature, hidden, num_class)

    out = gcn_net_forward(x, edge_index, params)
    out = jax.block_until_ready(out)

    assert out.shape == (num_nodes, num_class)
    assert bool(jnp.all(jnp.isfinite(out)))
    # rows of softmax output sum to ~1
    assert bool(jnp.all(jnp.abs(jnp.sum(out, axis=1) - 1.0) < 1e-4))
    print("KERNEL_OK")
</pallas_src>

<mosaic_0001>
module attributes {stable_mosaic.version = 11 : i64} {
  func.func private @main(%arg0: i32) attributes {dimension_semantics = [#tpu.dimension_semantics<core_parallel>], iteration_bounds = array<i64: 2>, tpu.core_type = #tpu.core_type<sc_scalar_subcore>, window_params = []} {
    return
  }
}

module attributes {stable_mosaic.version = 11 : i64} {
  func.func private @main(%arg0: i32) attributes {dimension_semantics = [#tpu.dimension_semantics<core_parallel>], iteration_bounds = array<i64: 2>, tpu.core_type = #tpu.core_type<sc_scalar_subcore>, window_params = []} {
    return
  }
}

module attributes {stable_mosaic.version = 11 : i64} {
  func.func @_fused_gcn_kernel(%arg0: memref<128x128xbf16, #tpu.memory_space<vmem>>, %arg1: memref<128x128xbf16, #tpu.memory_space<vmem>>, %arg2: memref<128x128xbf16, #tpu.memory_space<vmem>>, %arg3: memref<1x128xf32, #tpu.memory_space<vmem>>, %arg4: memref<128x128xbf16, #tpu.memory_space<vmem>>, %arg5: memref<1x128xf32, #tpu.memory_space<vmem>>, %arg6: memref<128x128xf32, #tpu.memory_space<vmem>>) attributes {dimension_semantics = [], scalar_prefetch = 0 : i64, scratch_operands = 0 : i64, tpu.core_type = #tpu.core_type<tc>} {
    %c0 = arith.constant 0 : index
    %c0_0 = arith.constant 0 : index
    %0 = vector.load %arg0[%c0, %c0_0] : memref<128x128xbf16, #tpu.memory_space<vmem>>, vector<128x128xbf16>
    %c0_1 = arith.constant 0 : index
    %c0_2 = arith.constant 0 : index
    %1 = vector.load %arg1[%c0_1, %c0_2] : memref<128x128xbf16, #tpu.memory_space<vmem>>, vector<128x128xbf16>
    %cst = arith.constant dense<0.000000e+00> : vector<128x128xf32>
    %2 = tpu.matmul %0, %1, %cst {dimension_numbers = #tpu.dot_dimension_numbers<[1], [0], [0], [1], [0, 0, 1, 1], [], []>} : vector<128x128xbf16>, vector<128x128xbf16>, vector<128x128xf32> -> vector<128x128xf32>
    %3 = arith.truncf %2 : vector<128x128xf32> to vector<128x128xbf16>
    %c0_3 = arith.constant 0 : index
    %c0_4 = arith.constant 0 : index
    %4 = vector.load %arg2[%c0_3, %c0_4] : memref<128x128xbf16, #tpu.memory_space<vmem>>, vector<128x128xbf16>
    %cst_5 = arith.constant dense<0.000000e+00> : vector<128x128xf32>
    %5 = tpu.matmul %3, %4, %cst_5 {dimension_numbers = #tpu.dot_dimension_numbers<[1], [0], [0], [1], [0, 0, 1, 1], [], []>} : vector<128x128xbf16>, vector<128x128xbf16>, vector<128x128xf32> -> vector<128x128xf32>
    %c0_6 = arith.constant 0 : index
    %c0_7 = arith.constant 0 : index
    %6 = vector.load %arg3[%c0_6, %c0_7] : memref<1x128xf32, #tpu.memory_space<vmem>>, vector<1x128xf32>
    %7 = vector.broadcast %6 : vector<1x128xf32> to vector<128x128xf32>
    %8 = arith.addf %5, %7 : vector<128x128xf32>
    %cst_8 = arith.constant 0.000000e+00 : f32
    %9 = vector.broadcast %cst_8 : f32 to vector<128x128xf32>
    %10 = arith.maximumf %8, %9 : vector<128x128xf32>
    %11 = arith.truncf %10 : vector<128x128xf32> to vector<128x128xbf16>
    %c0_9 = arith.constant 0 : index
    %c0_10 = arith.constant 0 : index
    %12 = vector.load %arg4[%c0_9, %c0_10] : memref<128x128xbf16, #tpu.memory_space<vmem>>, vector<128x128xbf16>
    %cst_11 = arith.constant dense<0.000000e+00> : vector<128x128xf32>
    %13 = tpu.matmul %11, %12, %cst_11 {dimension_numbers = #tpu.dot_dimension_numbers<[1], [0], [0], [1], [0, 0, 1, 1], [], []>} : vector<128x128xbf16>, vector<128x128xbf16>, vector<128x128xf32> -> vector<128x128xf32>
    %14 = arith.truncf %13 : vector<128x128xf32> to vector<128x128xbf16>
    %cst_12 = arith.constant dense<0.000000e+00> : vector<128x128xf32>
    %15 = tpu.matmul %0, %14, %cst_12 {dimension_numbers = #tpu.dot_dimension_numbers<[1], [0], [0], [1], [0, 0, 1, 1], [], []>} : vector<128x128xbf16>, vector<128x128xbf16>, vector<128x128xf32> -> vector<128x128xf32>
    %c0_13 = arith.constant 0 : index
    %c0_14 = arith.constant 0 : index
    %16 = vector.load %arg5[%c0_13, %c0_14] : memref<1x128xf32, #tpu.memory_space<vmem>>, vector<1x128xf32>
    %17 = vector.broadcast %16 : vector<1x128xf32> to vector<128x128xf32>
    %18 = arith.addf %15, %17 : vector<128x128xf32>
    %19 = tpu.iota {dimensions = array<i32: 1>} : vector<128x128xi32>
    %c8_i32 = arith.constant 8 : i32
    %20 = vector.broadcast %c8_i32 : i32 to vector<128x128xi32>
    %21 = arith.cmpi slt, %19, %20 : vector<128x128xi32>
    %cst_15 = arith.constant -1.000000e+30 : f32
    %22 = vector.broadcast %cst_15 : f32 to vector<128x128xf32>
    %23 = arith.select %21, %18, %22 : vector<128x128xi1>, vector<128x128xf32>
    %cst_16 = arith.constant dense<0xFF800000> : vector<128xf32>
    %24 = vector.multi_reduction <maximumf>, %23, %cst_16 [1] : vector<128x128xf32> to vector<128xf32>
    %25 = vector.shape_cast %24 : vector<128xf32> to vector<128x1xf32>
    %26 = vector.broadcast %25 : vector<128x1xf32> to vector<128x128xf32>
    %27 = arith.subf %23, %26 : vector<128x128xf32>
    %28 = math.exp %27 : vector<128x128xf32>
    %cst_17 = arith.constant dense<0.000000e+00> : vector<128xf32>
    %29 = vector.multi_reduction <add>, %28, %cst_17 [1] : vector<128x128xf32> to vector<128xf32>
    %30 = vector.shape_cast %29 : vector<128xf32> to vector<128x1xf32>
    %31 = tpu.reciprocal %30 {approx = true} : vector<128x1xf32> -> vector<128x1xf32>
    %32 = arith.mulf %30, %31 : vector<128x1xf32>
    %cst_18 = arith.constant 2.000000e+00 : f32
    %33 = vector.broadcast %cst_18 : f32 to vector<128x1xf32>
    %34 = arith.subf %33, %32 : vector<128x1xf32>
    %35 = arith.mulf %31, %34 : vector<128x1xf32>
    %36 = vector.broadcast %35 : vector<128x1xf32> to vector<128x128xf32>
    %37 = arith.mulf %28, %36 : vector<128x128xf32>
    %c0_19 = arith.constant 0 : index
    %c0_20 = arith.constant 0 : index
    %38 = vector.load %arg6[%c0_19, %c0_20] : memref<128x128xf32, #tpu.memory_space<vmem>>, vector<128x128xf32>
    tpu.vector_store %arg6[%c0_19, %c0_20], %37 {strides = array<i32>} : memref<128x128xf32, #tpu.memory_space<vmem>>, vector<128x128xf32>,
    return
  }
}

</mosaic_0001>

<llo_original>
// kernel: gcn_net_forward.1
$region0: #{gcn_net_forward.1}
  #allocation0 [shape = 'u32[]', space=smem, size = 0x4, offset = 0x4, fixed_abs, tag = 'smem constant byte address 0x4 - core index']
  #allocation1 [shape = 'u32[144,128]{1,0:T(1,128)}', space=vmem, size = 0x12000, scoped, tag = 'internal scratch']
  %s0 = inlined_call_operand.vmem [shape: bf16[128,128], index: 0, kind: input, shape index: {}]
  %s1 = inlined_call_operand.vmem [shape: bf16[128,128], index: 1, kind: input, shape index: {}]
  %s2 = inlined_call_operand.vmem [shape: bf16[128,128], index: 2, kind: input, shape index: {}]
  %s3 = inlined_call_operand.vmem [shape: f32[1,128], index: 3, kind: input, shape index: {}]
  %s4 = inlined_call_operand.vmem [shape: bf16[128,128], index: 4, kind: input, shape index: {}]
  %s5 = inlined_call_operand.vmem [shape: f32[1,128], index: 5, kind: input, shape index: {}]
  %s6 = inlined_call_operand.vmem [shape: f32[128,128], index: 6, kind: output, shape index: {}]
  %s7 = sld [smem:[#allocation0]]
  $region34: #{gcn_net_forward.1} parent=0
    _
  %s9 = ssub.s32 1, %s7
  %s10 = scalar_select 0, %s9, %s7
  // Predicated region
  $region2: #{gcn_net_forward.1} parent=0 // pred_check
    _
  $region3: #{gcn_net_forward.1} parent=0 // pred_check_branch
    %12 = sbr.rel (0) target = $region5
  $region4: #{gcn_net_forward.1} parent=0 // pred_region
    _
  $region5: #{gcn_net_forward.1} parent=0 // pred_fallthru
    _
  // Predicated region
  $region6: #{gcn_net_forward.1} parent=0 // pred_check
    _
  $region7: #{gcn_net_forward.1} parent=0 // pred_check_branch
    %14 = sbr.rel (0) target = $region9
  $region8: #{gcn_net_forward.1} parent=0 // pred_region
    _
  $region9: #{gcn_net_forward.1} parent=0 // pred_fallthru
    _
  // Predicated region
  $region10: #{gcn_net_forward.1} parent=0 // pred_check
    _
  $region11: #{gcn_net_forward.1} parent=0 // pred_check_branch
    %16 = sbr.rel (0) target = $region13
  $region12: #{gcn_net_forward.1} parent=0 // pred_region
    _
  $region13: #{gcn_net_forward.1} parent=0 // pred_fallthru
    _
  // Predicated region
  $region14: #{gcn_net_forward.1} parent=0 // pred_check
    _
  $region15: #{gcn_net_forward.1} parent=0 // pred_check_branch
    %18 = sbr.rel (0) target = $region17
  $region16: #{gcn_net_forward.1} parent=0 // pred_region
    _
  $region17: #{gcn_net_forward.1} parent=0 // pred_fallthru
    _
  // Predicated region
  $region18: #{gcn_net_forward.1} parent=0 // pred_check
    _
  $region19: #{gcn_net_forward.1} parent=0 // pred_check_branch
    %20 = sbr.rel (0) target = $region21
  $region20: #{gcn_net_forward.1} parent=0 // pred_region
    _
  $region21: #{gcn_net_forward.1} parent=0 // pred_fallthru
    _
  // Predicated region
  $region22: #{gcn_net_forward.1} parent=0 // pred_check
    _
  $region23: #{gcn_net_forward.1} parent=0 // pred_check_branch
    %22 = sbr.rel (0) target = $region25
  $region24: #{gcn_net_forward.1} parent=0 // pred_region
    _
  $region25: #{gcn_net_forward.1} parent=0 // pred_fallthru
    _
  %v24 = vld [vmem:[%s0] sm:$0xf]
  %v25 = vld [vmem:[%s0 + $0x4] sm:$0xf]
  %v26 = vld [vmem:[%s0 + $0x8] sm:$0xf]
  %v27 = vld [vmem:[%s0 + $0xc] sm:$0xf]
  %v28 = vld [vmem:[%s0 + $0x10] sm:$0xf]
  %v29 = vld [vmem:[%s0 + $0x14] sm:$0xf]
  %v30 = vld [vmem:[%s0 + $0x18] sm:$0xf]
  %v31 = vld [vmem:[%s0 + $0x1c] sm:$0xf]
  %v32 = vld [vmem:[%s0 + $0x20] sm:$0xf]
  %v33 = vld [vmem:[%s0 + $0x24] sm:$0xf]
  %v34 = vld [vmem:[%s0 + $0x28] sm:$0xf]
  %v35 = vld [vmem:[%s0 + $0x2c] sm:$0xf]
  %v36 = vld [vmem:[%s0 + $0x30] sm:$0xf]
  %v37 = vld [vmem:[%s0 + $0x34] sm:$0xf]
  %v38 = vld [vmem:[%s0 + $0x38] sm:$0xf]
  %v39 = vld [vmem:[%s0 + $0x3c] sm:$0xf]
  %v40 = vld [vmem:[%s1] sm:$0xf]
  %v41 = vld [vmem:[%s1 + $0x4] sm:$0xf]
  %v42 = vld [vmem:[%s1 + $0x8] sm:$0xf]
  %v43 = vld [vmem:[%s1 + $0xc] sm:$0xf]
  %v44 = vld [vmem:[%s1 + $0x10] sm:$0xf]
  %v45 = vld [vmem:[%s1 + $0x14] sm:$0xf]
  %v46 = vld [vmem:[%s1 + $0x18] sm:$0xf]
  %v47 = vld [vmem:[%s1 + $0x1c] sm:$0xf]
  %v48 = vld [vmem:[%s1 + $0x20] sm:$0xf]
  %v49 = vld [vmem:[%s1 + $0x24] sm:$0xf]
  %v50 = vld [vmem:[%s1 + $0x28] sm:$0xf]
  %v51 = vld [vmem:[%s1 + $0x2c] sm:$0xf]
  %v52 = vld [vmem:[%s1 + $0x30] sm:$0xf]
  %v53 = vld [vmem:[%s1 + $0x34] sm:$0xf]
  %v54 = vld [vmem:[%s1 + $0x38] sm:$0xf]
  %v55 = vld [vmem:[%s1 + $0x3c] sm:$0xf]
  %v72 = vunpack.c.l.b16 %v24
  %v73 = vunpack.c.l.b16 %v25
  %v74 = vunpack.c.l.b16 %v26
  %v75 = vunpack.c.l.b16 %v27
  %v76 = vunpack.c.l.b16 %v28
  %v77 = vunpack.c.l.b16 %v29
  %v78 = vunpack.c.l.b16 %v30
  %v79 = vunpack.c.l.b16 %v31
  %v80 = vunpack.c.l.b16 %v32
  %v81 = vunpack.c.l.b16 %v33
  %v82 = vunpack.c.l.b16 %v34
  %v83 = vunpack.c.l.b16 %v35
  %v84 = vunpack.c.l.b16 %v36
  %v85 = vunpack.c.l.b16 %v37
  %v86 = vunpack.c.l.b16 %v38
  %v87 = vunpack.c.l.b16 %v39
  %v88 = vpack.c.b16 %v73, %v72
  %v89 = vpack.c.b16 %v75, %v74
  %v90 = vpack.c.b16 %v77, %v76
  %v91 = vpack.c.b16 %v79, %v78
  %v92 = vpack.c.b16 %v81, %v80
  %v93 = vpack.c.b16 %v83, %v82
  %v94 = vpack.c.b16 %v85, %v84
  %v95 = vpack.c.b16 %v87, %v86
  %v120 = vunpack.c.l.b16 %v40
  %v121 = vunpack.c.l.b16 %v41
  %v122 = vunpack.c.l.b16 %v42
  %v123 = vunpack.c.l.b16 %v43
  %v124 = vunpack.c.l.b16 %v44
  %v125 = vunpack.c.l.b16 %v45
  %v126 = vunpack.c.l.b16 %v46
  %v127 = vunpack.c.l.b16 %v47
  %v128 = vunpack.c.l.b16 %v48
  %v129 = vunpack.c.l.b16 %v49
  %v130 = vunpack.c.l.b16 %v50
  %v131 = vunpack.c.l.b16 %v51
  %v132 = vunpack.c.l.b16 %v52
  %v133 = vunpack.c.l.b16 %v53
  %v134 = vunpack.c.l.b16 %v54
  %v135 = vunpack.c.l.b16 %v55
  %v136 = vpack.c.b16 %v121, %v120
  %v137 = vpack.c.b16 %v123, %v122
  %v138 = vpack.c.b16 %v125, %v124
  %v139 = vpack.c.b16 %v127, %v126
  %v140 = vpack.c.b16 %v129, %v128
  %v141 = vpack.c.b16 %v131, %v130
  %v142 = vpack.c.b16 %v133, %v132
  %v143 = vpack.c.b16 %v135, %v134
  %152 = vmatprep.subr.bf16.mxu0 0
  %153 = vmatpush1.bf16.msra.mxu0 %v136
  %154 = vmatprep.subr.bf16.mxu0 0
  %155 = vmatpush1.bf16.msra.mxu0 %v137
  %156 = vmatprep.subr.bf16.mxu0 0
  %157 = vmatpush1.bf16.msra.mxu0 %v138
  %158 = vmatprep.subr.bf16.mxu0 0
  %159 = vmatpush1.bf16.msra.mxu0 %v139
  %160 = vmatprep.subr.bf16.mxu0 0
  %161 = vmatpush1.bf16.msra.mxu0 %v140
  %162 = vmatprep.subr.bf16.mxu0 0
  %163 = vmatpush1.bf16.msra.mxu0 %v141
  %164 = vmatprep.subr.bf16.mxu0 0
  %165 = vmatpush1.bf16.msra.mxu0 %v142
  %166 = vmatprep.subr.bf16.mxu0 0
  %167 = vmatpush1.bf16.msra.mxu0 %v143
  %168 = vmatprep.subr.bf16.mxu0 0
  %169 = vmatpush1.bf16.msra.mxu0 0
  %170 = vmatprep.subr.bf16.mxu0 0
  %171 = vmatpush1.bf16.msra.mxu0 0
  %172 = vmatprep.subr.bf16.mxu0 0
  %173 = vmatpush1.bf16.msra.mxu0 0
  %174 = vmatprep.subr.bf16.mxu0 0
  %175 = vmatpush1.bf16.msra.mxu0 0
  %176 = vmatprep.subr.bf16.mxu0 0
  %177 = vmatpush1.bf16.msra.mxu0 0
  %178 = vmatprep.subr.bf16.mxu0 0
  %179 = vmatpush1.bf16.msra.mxu0 0
  %180 = vmatprep.subr.bf16.mxu0 0
  %181 = vmatpush1.bf16.msra.mxu0 0
  %182 = vmatprep.subr.bf16.mxu0 0
  %183 = vmatpush1.bf16.msra.mxu0 0
  %184 = vmatprep.mubr.bf16.mxu0 0
  %185 = vmatmul.mubr.bf16.gmra.mrb[0].mxu0 %v88
  %v186 = vpop.f32.mrb[0].mxu0
  %v187 = vadd.f32 0.0, %v186
  %v188 = vpop.f32.mrb[0].mxu0
  %v189 = vpop.f32.mrb[0].mxu0
  %v190 = vadd.f32 0.0, %v189
  %v191 = vpop.f32.mrb[0].mxu0
  %192 = vmatprep.mubr.bf16.mxu0 0
  %193 = vmatmul.mubr.bf16.gmra.mrb[0].mxu0 %v89
  %v194 = vpop.f32.mrb[0].mxu0
  %v195 = vadd.f32 0.0, %v194
  %v196 = vpop.f32.mrb[0].mxu0
  %v197 = vpop.f32.mrb[0].mxu0
  %v198 = vadd.f32 0.0, %v197
  %v199 = vpop.f32.mrb[0].mxu0
  %200 = vmatprep.mubr.bf16.mxu0 0
  %201 = vmatmul.mubr.bf16.gmra.mrb[0].mxu0 %v90
  %v202 = vpop.f32.mrb[0].mxu0
  %v203 = vadd.f32 0.0, %v202
  %v204 = vpop.f32.mrb[0].mxu0
  %v205 = vpop.f32.mrb[0].mxu0
  %v206 = vadd.f32 0.0, %v205
  %v207 = vpop.f32.mrb[0].mxu0
  %208 = vmatprep.mubr.bf16.mxu0 0
  %209 = vmatmul.mubr.bf16.gmra.mrb[0].mxu0 %v91
  %v210 = vpop.f32.mrb[0].mxu0
  %v211 = vadd.f32 0.0, %v210
  %v212 = vpop.f32.mrb[0].mxu0
  %v213 = vpop.f32.mrb[0].mxu0
  %v214 = vadd.f32 0.0, %v213
  %v215 = vpop.f32.mrb[0].mxu0
  %216 = vmatprep.mubr.bf16.mxu0 0
  %217 = vmatmul.mubr.bf16.gmra.mrb[0].mxu0 %v92
  %v218 = vpop.f32.mrb[0].mxu0
  %v219 = vadd.f32 0.0, %v218
  %v220 = vpop.f32.mrb[0].mxu0
  %v221 = vpop.f32.mrb[0].mxu0
  %v222 = vadd.f32 0.0, %v221
  %v223 = vpop.f32.mrb[0].mxu0
  %224 = vmatprep.mubr.bf16.mxu0 0
  %225 = vmatmul.mubr.bf16.gmra.mrb[0].mxu0 %v93
  %v226 = vpop.f32.mrb[0].mxu0
  %v227 = vadd.f32 0.0, %v226
  %v228 = vpop.f32.mrb[0].mxu0
  %v229 = vpop.f32.mrb[0].mxu0
  %v230 = vadd.f32 0.0, %v229
  %v231 = vpop.f32.mrb[0].mxu0
  %232 = vmatprep.mubr.bf16.mxu0 0
  %233 = vmatmul.mubr.bf16.gmra.mrb[0].mxu0 %v94
  %v234 = vpop.f32.mrb[0].mxu0
  %v235 = vadd.f32 0.0, %v234
  %v236 = vpop.f32.mrb[0].mxu0
  %v237 = vpop.f32.mrb[0].mxu0
  %v238 = vadd.f32 0.0, %v237
  %v239 = vpop.f32.mrb[0].mxu0
  %240 = vmatprep.mubr.bf16.mxu0 0
  %241 = vmatmul.mubr.bf16.gmra.mrb[0].mxu0 %v95
  %v242 = vpop.f32.mrb[0].mxu0
  %v243 = vadd.f32 0.0, %v242
  %v244 = vpop.f32.mrb[0].mxu0
  %v245 = vpop.f32.mrb[0].mxu0
  %v246 = vadd.f32 0.0, %v245
  %v247 = vpop.f32.mrb[0].mxu0
  %248 = vdwg.mxu0
  %v249 = vpack.c.bf16 %v190, %v187
  %v250 = vpack.c.bf16 %v198, %v195
  %v251 = vpack.c.bf16 %v206, %v203
  %v252 = vpack.c.bf16 %v214, %v211
  %v253 = vpack.c.bf16 %v222, %v219
  %v254 = vpack.c.bf16 %v230, %v227
  %v255 = vpack.c.bf16 %v238, %v235
  %v256 = vpack.c.bf16 %v246, %v243
  %v257 = vld [vmem:[%s2] sm:$0xf]
  %v258 = vld [vmem:[%s2 + $0x4] sm:$0xf]
  %v259 = vld [vmem:[%s2 + $0x8] sm:$0xf]
  %v260 = vld [vmem:[%s2 + $0xc] sm:$0xf]
  %v261 = vld [vmem:[%s2 + $0x10] sm:$0xf]
  %v262 = vld [vmem:[%s2 + $0x14] sm:$0xf]
  %v263 = vld [vmem:[%s2 + $0x18] sm:$0xf]
  %v264 = vld [vmem:[%s2 + $0x1c] sm:$0xf]
  %v265 = vld [vmem:[%s2 + $0x20] sm:$0xf]
  %v266 = vld [vmem:[%s2 + $0x24] sm:$0xf]
  %v267 = vld [vmem:[%s2 + $0x28] sm:$0xf]
  %v268 = vld [vmem:[%s2 + $0x2c] sm:$0xf]
  %v269 = vld [vmem:[%s2 + $0x30] sm:$0xf]
  %v270 = vld [vmem:[%s2 + $0x34] sm:$0xf]
  %v271 = vld [vmem:[%s2 + $0x38] sm:$0xf]
  %v272 = vld [vmem:[%s2 + $0x3c] sm:$0xf]
  %v273 = vld [vmem:[%s3] sm:$0x1]
  %v275 = vlaneseq
  %v276 = vshrl.u32 %v275, 7
  %v277 = vsub.s32 0, %v276
  %v278 = vrot.slane %v273, %v277
  %v296 = vunpack.c.l.b16 %v257
  %v297 = vunpack.c.l.b16 %v258
  %v298 = vunpack.c.l.b16 %v259
  %v299 = vunpack.c.l.b16 %v260
  %v300 = vunpack.c.l.b16 %v261
  %v301 = vunpack.c.l.b16 %v262
  %v302 = vunpack.c.l.b16 %v263
  %v303 = vunpack.c.l.b16 %v264
  %v304 = vunpack.c.l.b16 %v265
  %v305 = vunpack.c.l.b16 %v266
  %v306 = vunpack.c.l.b16 %v267
  %v307 = vunpack.c.l.b16 %v268
  %v308 = vunpack.c.l.b16 %v269
  %v309 = vunpack.c.l.b16 %v270
  %v310 = vunpack.c.l.b16 %v271
  %v311 = vunpack.c.l.b16 %v272
  %v312 = vpack.c.b16 %v297, %v296
  %v313 = vpack.c.b16 %v299, %v298
  %v314 = vpack.c.b16 %v301, %v300
  %v315 = vpack.c.b16 %v303, %v302
  %v316 = vpack.c.b16 %v305, %v304
  %v317 = vpack.c.b16 %v307, %v306
  %v318 = vpack.c.b16 %v309, %v308
  %v319 = vpack.c.b16 %v311, %v310
  %328 = vmatprep.subr.bf16.mxu0 0
  %329 = vmatpush1.bf16.msra.mxu0 %v312
  %330 = vmatprep.subr.bf16.mxu0 0
  %331 = vmatpush1.bf16.msra.mxu0 %v313
  %332 = vmatprep.subr.bf16.mxu0 0
  %333 = vmatpush1.bf16.msra.mxu0 %v314
  %334 = vmatprep.subr.bf16.mxu0 0
  %335 = vmatpush1.bf16.msra.mxu0 %v315
  %336 = vmatprep.subr.bf16.mxu0 0
  %337 = vmatpush1.bf16.msra.mxu0 %v316
  %338 = vmatprep.subr.bf16.mxu0 0
  %339 = vmatpush1.bf16.msra.mxu0 %v317
  %340 = vmatprep.subr.bf16.mxu0 0
  %341 = vmatpush1.bf16.msra.mxu0 %v318
  %342 = vmatprep.subr.bf16.mxu0 0
  %343 = vmatpush1.bf16.msra.mxu0 %v319
  %344 = vmatprep.subr.bf16.mxu0 0
  %345 = vmatpush1.bf16.msra.mxu0 0
  %346 = vmatprep.subr.bf16.mxu0 0
  %347 = vmatpush1.bf16.msra.mxu0 0
  %348 = vmatprep.subr.bf16.mxu0 0
  %349 = vmatpush1.bf16.msra.mxu0 0
  %350 = vmatprep.subr.bf16.mxu0 0
  %351 = vmatpush1.bf16.msra.mxu0 0
  %352 = vmatprep.subr.bf16.mxu0 0
  %353 = vmatpush1.bf16.msra.mxu0 0
  %354 = vmatprep.subr.bf16.mxu0 0
  %355 = vmatpush1.bf16.msra.mxu0 0
  %356 = vmatprep.subr.bf16.mxu0 0
  %357 = vmatpush1.bf16.msra.mxu0 0
  %358 = vmatprep.subr.bf16.mxu0 0
  %359 = vmatpush1.bf16.msra.mxu0 0
  %360 = vmatprep.mubr.bf16.mxu0 0
  %361 = vmatmul.mubr.bf16.gmra.mrb[0].mxu0 %v249
  %v362 = vpop.f32.mrb[0].mxu0
  %v363 = vadd.f32 %v278, %v362
  %v364 = vpop.f32.mrb[0].mxu0
  %v365 = vpop.f32.mrb[0].mxu0
  %v366 = vadd.f32 %v278, %v365
  %v367 = vpop.f32.mrb[0].mxu0
  %368 = vmatprep.mubr.bf16.mxu0 0
  %369 = vmatmul.mubr.bf16.gmra.mrb[0].mxu0 %v250
  %v370 = vpop.f32.mrb[0].mxu0
  %v371 = vadd.f32 %v278, %v370
  %v372 = vpop.f32.mrb[0].mxu0
  %v373 = vpop.f32.mrb[0].mxu0
  %v374 = vadd.f32 %v278, %v373
  %v375 = vpop.f32.mrb[0].mxu0
  %376 = vmatprep.mubr.bf16.mxu0 0
  %377 = vmatmul.mubr.bf16.gmra.mrb[0].mxu0 %v251
  %v378 = vpop.f32.mrb[0].mxu0
  %v379 = vadd.f32 %v278, %v378
  %v380 = vpop.f32.mrb[0].mxu0
  %v381 = vpop.f32.mrb[0].mxu0
  %v382 = vadd.f32 %v278, %v381
  %v383 = vpop.f32.mrb[0].mxu0
  %384 = vmatprep.mubr.bf16.mxu0 0
  %385 = vmatmul.mubr.bf16.gmra.mrb[0].mxu0 %v252
  %v386 = vpop.f32.mrb[0].mxu0
  %v387 = vadd.f32 %v278, %v386
  %v388 = vpop.f32.mrb[0].mxu0
  %v389 = vpop.f32.mrb[0].mxu0
  %v390 = vadd.f32 %v278, %v389
  %v391 = vpop.f32.mrb[0].mxu0
  %392 = vmatprep.mubr.bf16.mxu0 0
  %393 = vmatmul.mubr.bf16.gmra.mrb[0].mxu0 %v253
  %v394 = vpop.f32.mrb[0].mxu0
  %v395 = vadd.f32 %v278, %v394
  %v396 = vpop.f32.mrb[0].mxu0
  %v397 = vpop.f32.mrb[0].mxu0
  %v398 = vadd.f32 %v278, %v397
  %v399 = vpop.f32.mrb[0].mxu0
  %400 = vmatprep.mubr.bf16.mxu0 0
  %401 = vmatmul.mubr.bf16.gmra.mrb[0].mxu0 %v254
  %v402 = vpop.f32.mrb[0].mxu0
  %v403 = vadd.f32 %v278, %v402
  %v404 = vpop.f32.mrb[0].mxu0
  %v405 = vpop.f32.mrb[0].mxu0
  %v406 = vadd.f32 %v278, %v405
  %v407 = vpop.f32.mrb[0].mxu0
  %408 = vmatprep.mubr.bf16.mxu0 0
  %409 = vmatmul.mubr.bf16.gmra.mrb[0].mxu0 %v255
  %v410 = vpop.f32.mrb[0].mxu0
  %v411 = vadd.f32 %v278, %v410
  %v412 = vpop.f32.mrb[0].mxu0
  %v413 = vpop.f32.mrb[0].mxu0
  %v414 = vadd.f32 %v278, %v413
  %v415 = vpop.f32.mrb[0].mxu0
  %416 = vmatprep.mubr.bf16.mxu0 0
  %417 = vmatmul.mubr.bf16.gmra.mrb[0].mxu0 %v256
  %v418 = vpop.f32.mrb[0].mxu0
  %v419 = vadd.f32 %v278, %v418
  %v420 = vpop.f32.mrb[0].mxu0
  %v421 = vpop.f32.mrb[0].mxu0
  %v422 = vadd.f32 %v278, %v421
  %v423 = vpop.f32.mrb[0].mxu0
  %424 = vdwg.mxu0
  %v425 = vmax.f32 %v363, 0.0
  %v426 = vmax.f32 %v366, 0.0
  %v427 = vmax.f32 %v371, 0.0
  %v428 = vmax.f32 %v374, 0.0
  %v429 = vmax.f32 %v379, 0.0
  %v430 = vmax.f32 %v382, 0.0
  %v431 = vmax.f32 %v387, 0.0
  %v432 = vmax.f32 %v390, 0.0
  %v433 = vmax.f32 %v395, 0.0
  %v434 = vmax.f32 %v398, 0.0
  %v435 = vmax.f32 %v403, 0.0
  %v436 = vmax.f32 %v406, 0.0
  %v437 = vmax.f32 %v411, 0.0
  %v438 = vmax.f32 %v414, 0.0
  %v439 = vmax.f32 %v419, 0.0
  %v440 = vmax.f32 %v422, 0.0
  %v441 = vpack.c.bf16 %v426, %v425
  %v442 = vpack.c.bf16 %v428, %v427
  %v443 = vpack.c.bf16 %v430, %v429
  %v444 = vpack.c.bf16 %v432, %v431
  %v445 = vpack.c.bf16 %v434, %v433
  %v446 = vpack.c.bf16 %v436, %v435
  %v447 = vpack.c.bf16 %v438, %v437
  %v448 = vpack.c.bf16 %v440, %v439
  %v449 = vld [vmem:[%s4] sm:$0xf]
  %v450 = vld [vmem:[%s4 + $0x4] sm:$0xf]
  %v451 = vld [vmem:[%s4 + $0x8] sm:$0xf]
  %v452 = vld [vmem:[%s4 + $0xc] sm:$0xf]
  %v453 = vld [vmem:[%s4 + $0x10] sm:$0xf]
  %v454 = vld [vmem:[%s4 + $0x14] sm:$0xf]
  %v455 = vld [vmem:[%s4 + $0x18] sm:$0xf]
  %v456 = vld [vmem:[%s4 + $0x1c] sm:$0xf]
  %v457 = vld [vmem:[%s4 + $0x20] sm:$0xf]
  %v458 = vld [vmem:[%s4 + $0x24] sm:$0xf]
  %v459 = vld [vmem:[%s4 + $0x28] sm:$0xf]
  %v460 = vld [vmem:[%s4 + $0x2c] sm:$0xf]
  %v461 = vld [vmem:[%s4 + $0x30] sm:$0xf]
  %v462 = vld [vmem:[%s4 + $0x34] sm:$0xf]
  %v463 = vld [vmem:[%s4 + $0x38] sm:$0xf]
  %v464 = vld [vmem:[%s4 + $0x3c] sm:$0xf]
  %v481 = vunpack.c.l.b16 %v449
  %v482 = vunpack.c.l.b16 %v450
  %v483 = vunpack.c.l.b16 %v451
  %v484 = vunpack.c.l.b16 %v452
  %v485 = vunpack.c.l.b16 %v453
  %v486 = vunpack.c.l.b16 %v454
  %v487 = vunpack.c.l.b16 %v455
  %v488 = vunpack.c.l.b16 %v456
  %v489 = vunpack.c.l.b16 %v457
  %v490 = vunpack.c.l.b16 %v458
  %v491 = vunpack.c.l.b16 %v459
  %v492 = vunpack.c.l.b16 %v460
  %v493 = vunpack.c.l.b16 %v461
  %v494 = vunpack.c.l.b16 %v462
  %v495 = vunpack.c.l.b16 %v463
  %v496 = vunpack.c.l.b16 %v464
  %v497 = vpack.c.b16 %v482, %v481
  %v498 = vpack.c.b16 %v484, %v483
  %v499 = vpack.c.b16 %v486, %v485
  %v500 = vpack.c.b16 %v488, %v487
  %v501 = vpack.c.b16 %v490, %v489
  %v502 = vpack.c.b16 %v492, %v491
  %v503 = vpack.c.b16 %v494, %v493
  %v504 = vpack.c.b16 %v496, %v495
  %513 = vmatprep.subr.bf16.mxu0 0
  %514 = vmatpush1.bf16.msra.mxu0 %v497
  %515 = vmatprep.subr.bf16.mxu0 0
  %516 = vmatpush1.bf16.msra.mxu0 %v498
  %517 = vmatprep.subr.bf16.mxu0 0
  %518 = vmatpush1.bf16.msra.mxu0 %v499
  %519 = vmatprep.subr.bf16.mxu0 0
  %520 = vmatpush1.bf16.msra.mxu0 %v500
  %521 = vmatprep.subr.bf16.mxu0 0
  %522 = vmatpush1.bf16.msra.mxu0 %v501
  %523 = vmatprep.subr.bf16.mxu0 0
  %524 = vmatpush1.bf16.msra.mxu0 %v502
  %525 = vmatprep.subr.bf16.mxu0 0
  %526 = vmatpush1.bf16.msra.mxu0 %v503
  %527 = vmatprep.subr.bf16.mxu0 0
  %528 = vmatpush1.bf16.msra.mxu0 %v504
  %529 = vmatprep.subr.bf16.mxu0 0
  %530 = vmatpush1.bf16.msra.mxu0 0
  %531 = vmatprep.subr.bf16.mxu0 0
  %532 = vmatpush1.bf16.msra.mxu0 0
  %533 = vmatprep.subr.bf16.mxu0 0
  %534 = vmatpush1.bf16.msra.mxu0 0
  %535 = vmatprep.subr.bf16.mxu0 0
  %536 = vmatpush1.bf16.msra.mxu0 0
  %537 = vmatprep.subr.bf16.mxu0 0
  %538 = vmatpush1.bf16.msra.mxu0 0
  %539 = vmatprep.subr.bf16.mxu0 0
  %540 = vmatpush1.bf16.msra.mxu0 0
  %541 = vmatprep.subr.bf16.mxu0 0
  %542 = vmatpush1.bf16.msra.mxu0 0
  %543 = vmatprep.subr.bf16.mxu0 0
  %544 = vmatpush1.bf16.msra.mxu0 0
  %545 = vmatprep.mubr.bf16.mxu0 0
  %546 = vmatmul.mubr.bf16.gmra.mrb[0].mxu0 %v441
  %v547 = vpop.f32.mrb[0].mxu0
  %v548 = vadd.f32 0.0, %v547
  %v549 = vpop.f32.mrb[0].mxu0
  %v550 = vpop.f32.mrb[0].mxu0
  %v551 = vadd.f32 0.0, %v550
  %v552 = vpop.f32.mrb[0].mxu0
  %553 = vmatprep.mubr.bf16.mxu0 0
  %554 = vmatmul.mubr.bf16.gmra.mrb[0].mxu0 %v442
  %v555 = vpop.f32.mrb[0].mxu0
  %v556 = vadd.f32 0.0, %v555
  %v557 = vpop.f32.mrb[0].mxu0
  %v558 = vpop.f32.mrb[0].mxu0
  %v559 = vadd.f32 0.0, %v558
  %v560 = vpop.f32.mrb[0].mxu0
  %561 = vmatprep.mubr.bf16.mxu0 0
  %562 = vmatmul.mubr.bf16.gmra.mrb[0].mxu0 %v443
  %v563 = vpop.f32.mrb[0].mxu0
  %v564 = vadd.f32 0.0, %v563
  %v565 = vpop.f32.mrb[0].mxu0
  %v566 = vpop.f32.mrb[0].mxu0
  %v567 = vadd.f32 0.0, %v566
  %v568 = vpop.f32.mrb[0].mxu0
  %569 = vmatprep.mubr.bf16.mxu0 0
  %570 = vmatmul.mubr.bf16.gmra.mrb[0].mxu0 %v444
  %v571 = vpop.f32.mrb[0].mxu0
  %v572 = vadd.f32 0.0, %v571
  %v573 = vpop.f32.mrb[0].mxu0
  %v574 = vpop.f32.mrb[0].mxu0
  %v575 = vadd.f32 0.0, %v574
  %v576 = vpop.f32.mrb[0].mxu0
  %577 = vmatprep.mubr.bf16.mxu0 0
  %578 = vmatmul.mubr.bf16.gmra.mrb[0].mxu0 %v445
  %v579 = vpop.f32.mrb[0].mxu0
  %v580 = vadd.f32 0.0, %v579
  %v581 = vpop.f32.mrb[0].mxu0
  %v582 = vpop.f32.mrb[0].mxu0
  %v583 = vadd.f32 0.0, %v582
  %v584 = vpop.f32.mrb[0].mxu0
  %585 = vmatprep.mubr.bf16.mxu0 0
  %586 = vmatmul.mubr.bf16.gmra.mrb[0].mxu0 %v446
  %v587 = vpop.f32.mrb[0].mxu0
  %v588 = vadd.f32 0.0, %v587
  %v589 = vpop.f32.mrb[0].mxu0
  %v590 = vpop.f32.mrb[0].mxu0
  %v591 = vadd.f32 0.0, %v590
  %v592 = vpop.f32.mrb[0].mxu0
  %593 = vmatprep.mubr.bf16.mxu0 0
  %594 = vmatmul.mubr.bf16.gmra.mrb[0].mxu0 %v447
  %v595 = vpop.f32.mrb[0].mxu0
  %v596 = vadd.f32 0.0, %v595
  %v597 = vpop.f32.mrb[0].mxu0
  %v598 = vpop.f32.mrb[0].mxu0
  %v599 = vadd.f32 0.0, %v598
  %v600 = vpop.f32.mrb[0].mxu0
  %601 = vmatprep.mubr.bf16.mxu0 0
  %602 = vmatmul.mubr.bf16.gmra.mrb[0].mxu0 %v448
  %v603 = vpop.f32.mrb[0].mxu0
  %v604 = vadd.f32 0.0, %v603
  %v605 = vpop.f32.mrb[0].mxu0
  %v606 = vpop.f32.mrb[0].mxu0
  %v607 = vadd.f32 0.0, %v606
  %v608 = vpop.f32.mrb[0].mxu0
  %609 = vdwg.mxu0
  %v610 = vpack.c.bf16 %v551, %v548
  %v611 = vpack.c.bf16 %v559, %v556
  %v612 = vpack.c.bf16 %v567, %v564
  %v613 = vpack.c.bf16 %v575, %v572
  %v614 = vpack.c.bf16 %v583, %v580
  %v615 = vpack.c.bf16 %v591, %v588
  %v616 = vpack.c.bf16 %v599, %v596
  %v617 = vpack.c.bf16 %v607, %v604
  %v618 = vld [vmem:[%s5] sm:$0x1]
  %v620 = vlaneseq
  %v621 = vshrl.u32 %v620, 7
  %v622 = vsub.s32 0, %v621
  %v623 = vrot.slane %v618, %v622
  %625 = vmatprep.subr.bf16.mxu0 0
  %626 = vmatpush1.bf16.msra.mxu0 %v610
  %627 = vmatprep.subr.bf16.mxu0 0
  %628 = vmatpush1.bf16.msra.mxu0 %v611
  %629 = vmatprep.subr.bf16.mxu0 0
  %630 = vmatpush1.bf16.msra.mxu0 %v612
  %631 = vmatprep.subr.bf16.mxu0 0
  %632 = vmatpush1.bf16.msra.mxu0 %v613
  %633 = vmatprep.subr.bf16.mxu0 0
  %634 = vmatpush1.bf16.msra.mxu0 %v614
  %635 = vmatprep.subr.bf16.mxu0 0
  %636 = vmatpush1.bf16.msra.mxu0 %v615
  %637 = vmatprep.subr.bf16.mxu0 0
  %638 = vmatpush1.bf16.msra.mxu0 %v616
  %639 = vmatprep.subr.bf16.mxu0 0
  %640 = vmatpush1.bf16.msra.mxu0 %v617
  %641 = vmatprep.subr.bf16.mxu0 0
  %642 = vmatpush1.bf16.msra.mxu0 0
  %643 = vmatprep.subr.bf16.mxu0 0
  %644 = vmatpush1.bf16.msra.mxu0 0
  %645 = vmatprep.subr.bf16.mxu0 0
  %646 = vmatpush1.bf16.msra.mxu0 0
  %647 = vmatprep.subr.bf16.mxu0 0
  %648 = vmatpush1.bf16.msra.mxu0 0
  %649 = vmatprep.subr.bf16.mxu0 0
  %650 = vmatpush1.bf16.msra.mxu0 0
  %651 = vmatprep.subr.bf16.mxu0 0
  %652 = vmatpush1.bf16.msra.mxu0 0
  %653 = vmatprep.subr.bf16.mxu0 0
  %654 = vmatpush1.bf16.msra.mxu0 0
  %655 = vmatprep.subr.bf16.mxu0 0
  %656 = vmatpush1.bf16.msra.mxu0 0
  %657 = vmatprep.mubr.bf16.mxu0 0
  %658 = vmatmul.mubr.bf16.gmra.mrb[0].mxu0 %v88
  %v659 = vpop.f32.mrb[0].mxu0
  %v660 = vadd.f32 %v623, %v659
  %v661 = vpop.f32.mrb[0].mxu0
  %v662 = vpop.f32.mrb[0].mxu0
  %v663 = vadd.f32 %v623, %v662
  %v664 = vpop.f32.mrb[0].mxu0
  %665 = vmatprep.mubr.bf16.mxu0 0
  %666 = vmatmul.mubr.bf16.gmra.mrb[0].mxu0 %v89
  %v667 = vpop.f32.mrb[0].mxu0
  %v668 = vadd.f32 %v623, %v667
  %v669 = vpop.f32.mrb[0].mxu0
  %v670 = vpop.f32.mrb[0].mxu0
  %v671 = vadd.f32 %v623, %v670
  %v672 = vpop.f32.mrb[0].mxu0
  %673 = vmatprep.mubr.bf16.mxu0 0
  %674 = vmatmul.mubr.bf16.gmra.mrb[0].mxu0 %v90
  %v675 = vpop.f32.mrb[0].mxu0
  %v676 = vadd.f32 %v623, %v675
  %v677 = vpop.f32.mrb[0].mxu0
  %v678 = vpop.f32.mrb[0].mxu0
  %v679 = vadd.f32 %v623, %v678
  %v680 = vpop.f32.mrb[0].mxu0
  %681 = vmatprep.mubr.bf16.mxu0 0
  %682 = vmatmul.mubr.bf16.gmra.mrb[0].mxu0 %v91
  %v683 = vpop.f32.mrb[0].mxu0
  %v684 = vadd.f32 %v623, %v683
  %v685 = vpop.f32.mrb[0].mxu0
  %v686 = vpop.f32.mrb[0].mxu0
  %v687 = vadd.f32 %v623, %v686
  %v688 = vpop.f32.mrb[0].mxu0
  %689 = vmatprep.mubr.bf16.mxu0 0
  %690 = vmatmul.mubr.bf16.gmra.mrb[0].mxu0 %v92
  %v691 = vpop.f32.mrb[0].mxu0
  %v692 = vadd.f32 %v623, %v691
  %v693 = vpop.f32.mrb[0].mxu0
  %v694 = vpop.f32.mrb[0].mxu0
  %v695 = vadd.f32 %v623, %v694
  %v696 = vpop.f32.mrb[0].mxu0
  %697 = vmatprep.mubr.bf16.mxu0 0
  %698 = vmatmul.mubr.bf16.gmra.mrb[0].mxu0 %v93
  %v699 = vpop.f32.mrb[0].mxu0
  %v700 = vadd.f32 %v623, %v699
  %v701 = vpop.f32.mrb[0].mxu0
  %v702 = vpop.f32.mrb[0].mxu0
  %v703 = vadd.f32 %v623, %v702
  %v704 = vpop.f32.mrb[0].mxu0
  %705 = vmatprep.mubr.bf16.mxu0 0
  %706 = vmatmul.mubr.bf16.gmra.mrb[0].mxu0 %v94
  %v707 = vpop.f32.mrb[0].mxu0
  %v708 = vadd.f32 %v623, %v707
  %v709 = vpop.f32.mrb[0].mxu0
  %v710 = vpop.f32.mrb[0].mxu0
  %v711 = vadd.f32 %v623, %v710
  %v712 = vpop.f32.mrb[0].mxu0
  %713 = vmatprep.mubr.bf16.mxu0 0
  %714 = vmatmul.mubr.bf16.gmra.mrb[0].mxu0 %v95
  %v715 = vpop.f32.mrb[0].mxu0
  %v716 = vadd.f32 %v623, %v715
  %v717 = vpop.f32.mrb[0].mxu0
  %v718 = vpop.f32.mrb[0].mxu0
  %v719 = vadd.f32 %v623, %v718
  %v720 = vpop.f32.mrb[0].mxu0
  %721 = vdwg.mxu0
  %v722 = vlaneseq
  %v723 = vand.u32 %v722, 127
  %vm724 = vcmp.lt.s32.totalorder %v723, 8
  %v725 = vsel %vm724, %v660, -1e+30
  %v726 = vsel %vm724, %v663, -1e+30
  %v727 = vsel %vm724, %v668, -1e+30
  %v728 = vsel %vm724, %v671, -1e+30
  %v729 = vsel %vm724, %v676, -1e+30
  %v730 = vsel %vm724, %v679, -1e+30
  %v731 = vsel %vm724, %v684, -1e+30
  %v732 = vsel %vm724, %v687, -1e+30
  %v733 = vsel %vm724, %v692, -1e+30
  %v734 = vsel %vm724, %v695, -1e+30
  %v735 = vsel %vm724, %v700, -1e+30
  %v736 = vsel %vm724, %v703, -1e+30
  %v737 = vsel %vm724, %v708, -1e+30
  %v738 = vsel %vm724, %v711, -1e+30
  %v739 = vsel %vm724, %v716, -1e+30
  %v740 = vsel %vm724, %v719, -1e+30
  %741 = vmax.xlane.f32.xlu0 %v725
  %v742 = vpop.xlane.xlu0 %741
  %743 = vmax.xlane.f32.xlu0 %v726
  %v744 = vpop.xlane.xlu0 %743
  %745 = vmax.xlane.f32.xlu0 %v727
  %v746 = vpop.xlane.xlu0 %745
  %747 = vmax.xlane.f32.xlu0 %v728
  %v748 = vpop.xlane.xlu0 %747
  %749 = vmax.xlane.f32.xlu0 %v729
  %v750 = vpop.xlane.xlu0 %749
  %751 = vmax.xlane.f32.xlu0 %v730
  %v752 = vpop.xlane.xlu0 %751
  %753 = vmax.xlane.f32.xlu0 %v731
  %v754 = vpop.xlane.xlu0 %753
  %755 = vmax.xlane.f32.xlu0 %v732
  %v756 = vpop.xlane.xlu0 %755
  %757 = vmax.xlane.f32.xlu0 %v733
  %v758 = vpop.xlane.xlu0 %757
  %759 = vmax.xlane.f32.xlu0 %v734
  %v760 = vpop.xlane.xlu0 %759
  %761 = vmax.xlane.f32.xlu0 %v735
  %v762 = vpop.xlane.xlu0 %761
  %763 = vmax.xlane.f32.xlu0 %v736
  %v764 = vpop.xlane.xlu0 %763
  %765 = vmax.xlane.f32.xlu0 %v737
  %v766 = vpop.xlane.xlu0 %765
  %767 = vmax.xlane.f32.xlu0 %v738
  %v768 = vpop.xlane.xlu0 %767
  %769 = vmax.xlane.f32.xlu0 %v739
  %v770 = vpop.xlane.xlu0 %769
  %771 = vmax.xlane.f32.xlu0 %v740
  %v772 = vpop.xlane.xlu0 %771
  %v773 = vsub.f32 %v725, %v742
  %v774 = vsub.f32 %v726, %v744
  %v775 = vsub.f32 %v727, %v746
  %v776 = vsub.f32 %v728, %v748
  %v777 = vsub.f32 %v729, %v750
  %v778 = vsub.f32 %v730, %v752
  %v779 = vsub.f32 %v731, %v754
  %v780 = vsub.f32 %v732, %v756
  %v781 = vsub.f32 %v733, %v758
  %v782 = vsub.f32 %v734, %v760
  %v783 = vsub.f32 %v735, %v762
  %v784 = vsub.f32 %v736, %v764
  %v785 = vsub.f32 %v737, %v766
  %v786 = vsub.f32 %v738, %v768
  %v787 = vsub.f32 %v739, %v770
  %v788 = vsub.f32 %v740, %v772
  %v789 = vmul.f32 %v773, 1.442695
  %v790 = vpow.pop %v789
  %v791 = vmul.f32 %v774, 1.442695
  %v792 = vpow.pop %v791
  %v793 = vmul.f32 %v775, 1.442695
  %v794 = vpow.pop %v793
  %v795 = vmul.f32 %v776, 1.442695
  %v796 = vpow.pop %v795
  %v797 = vmul.f32 %v777, 1.442695
  %v798 = vpow.pop %v797
  %v799 = vmul.f32 %v778, 1.442695
  %v800 = vpow.pop %v799
  %v801 = vmul.f32 %v779, 1.442695
  %v802 = vpow.pop %v801
  %v803 = vmul.f32 %v780, 1.442695
  %v804 = vpow.pop %v803
  %v805 = vmul.f32 %v781, 1.442695
  %v806 = vpow.pop %v805
  %v807 = vmul.f32 %v782, 1.442695
  %v808 = vpow.pop %v807
  %v809 = vmul.f32 %v783, 1.442695
  %v810 = vpow.pop %v809
  %v811 = vmul.f32 %v784, 1.442695
  %v812 = vpow.pop %v811
  %v813 = vmul.f32 %v785, 1.442695
  %v814 = vpow.pop %v813
  %v815 = vmul.f32 %v786, 1.442695
  %v816 = vpow.pop %v815
  %v817 = vmul.f32 %v787, 1.442695
  %v818 = vpow.pop %v817
  %v819 = vmul.f32 %v788, 1.442695
  %v820 = vpow.pop %v819
  %821 = vadd.xlane.f32.xlu0 %v790
  %v822 = vpop.xlane.xlu0 %821
  %823 = vadd.xlane.f32.xlu0 %v792
  %v824 = vpop.xlane.xlu0 %823
  %825 = vadd.xlane.f32.xlu0 %v794
  %v826 = vpop.xlane.xlu0 %825
  %827 = vadd.xlane.f32.xlu0 %v796
  %v828 = vpop.xlane.xlu0 %827
  %829 = vadd.xlane.f32.xlu0 %v798
  %v830 = vpop.xlane.xlu0 %829
  %831 = vadd.xlane.f32.xlu0 %v800
  %v832 = vpop.xlane.xlu0 %831
  %833 = vadd.xlane.f32.xlu0 %v802
  %v834 = vpop.xlane.xlu0 %833
  %835 = vadd.xlane.f32.xlu0 %v804
  %v836 = vpop.xlane.xlu0 %835
  %837 = vadd.xlane.f32.xlu0 %v806
  %v838 = vpop.xlane.xlu0 %837
  %839 = vadd.xlane.f32.xlu0 %v808
  %v840 = vpop.xlane.xlu0 %839
  %841 = vadd.xlane.f32.xlu0 %v810
  %v842 = vpop.xlane.xlu0 %841
  %843 = vadd.xlane.f32.xlu0 %v812
  %v844 = vpop.xlane.xlu0 %843
  %845 = vadd.xlane.f32.xlu0 %v814
  %v846 = vpop.xlane.xlu0 %845
  %847 = vadd.xlane.f32.xlu0 %v816
  %v848 = vpop.xlane.xlu0 %847
  %849 = vadd.xlane.f32.xlu0 %v818
  %v850 = vpop.xlane.xlu0 %849
  %851 = vadd.xlane.f32.xlu0 %v820
  %v852 = vpop.xlane.xlu0 %851
  %v853 = vrcp.pop %v822
  %v854 = vrcp.pop %v824
  %v855 = vrcp.pop %v826
  %v856 = vrcp.pop %v828
  %v857 = vrcp.pop %v830
  %v858 = vrcp.pop %v832
  %v859 = vrcp.pop %v834
  %v860 = vrcp.pop %v836
  %v861 = vrcp.pop %v838
  %v862 = vrcp.pop %v840
  %v863 = vrcp.pop %v842
  %v864 = vrcp.pop %v844
  %v865 = vrcp.pop %v846
  %v866 = vrcp.pop %v848
  %v867 = vrcp.pop %v850
  %v868 = vrcp.pop %v852
  %v869 = vmul.f32 %v822, %v853
  %v870 = vmul.f32 %v824, %v854
  %v871 = vmul.f32 %v826, %v855
  %v872 = vmul.f32 %v828, %v856
  %v873 = vmul.f32 %v830, %v857
  %v874 = vmul.f32 %v832, %v858
  %v875 = vmul.f32 %v834, %v859
  %v876 = vmul.f32 %v836, %v860
  %v877 = vmul.f32 %v838, %v861
  %v878 = vmul.f32 %v840, %v862
  %v879 = vmul.f32 %v842, %v863
  %v880 = vmul.f32 %v844, %v864
  %v881 = vmul.f32 %v846, %v865
  %v882 = vmul.f32 %v848, %v866
  %v883 = vmul.f32 %v850, %v867
  %v884 = vmul.f32 %v852, %v868
  %v885 = vsub.f32 2.0, %v869
  %v886 = vsub.f32 2.0, %v870
  %v887 = vsub.f32 2.0, %v871
  %v888 = vsub.f32 2.0, %v872
  %v889 = vsub.f32 2.0, %v873
  %v890 = vsub.f32 2.0, %v874
  %v891 = vsub.f32 2.0, %v875
  %v892 = vsub.f32 2.0, %v876
  %v893 = vsub.f32 2.0, %v877
  %v894 = vsub.f32 2.0, %v878
  %v895 = vsub.f32 2.0, %v879
  %v896 = vsub.f32 2.0, %v880
  %v897 = vsub.f32 2.0, %v881
  %v898 = vsub.f32 2.0, %v882
  %v899 = vsub.f32 2.0, %v883
  %v900 = vsub.f32 2.0, %v884
  %v901 = vmul.f32 %v853, %v885
  %v902 = vmul.f32 %v854, %v886
  %v903 = vmul.f32 %v855, %v887
  %v904 = vmul.f32 %v856, %v888
  %v905 = vmul.f32 %v857, %v889
  %v906 = vmul.f32 %v858, %v890
  %v907 = vmul.f32 %v859, %v891
  %v908 = vmul.f32 %v860, %v892
  %v909 = vmul.f32 %v861, %v893
  %v910 = vmul.f32 %v862, %v894
  %v911 = vmul.f32 %v863, %v895
  %v912 = vmul.f32 %v864, %v896
  %v913 = vmul.f32 %v865, %v897
  %v914 = vmul.f32 %v866, %v898
  %v915 = vmul.f32 %v867, %v899
  %v916 = vmul.f32 %v868, %v900
  %v917 = vmul.f32 %v790, %v901
  %v918 = vmul.f32 %v792, %v902
  %v919 = vmul.f32 %v794, %v903
  %v920 = vmul.f32 %v796, %v904
  %v921 = vmul.f32 %v798, %v905
  %v922 = vmul.f32 %v800, %v906
  %v923 = vmul.f32 %v802, %v907
  %v924 = vmul.f32 %v804, %v908
  %v925 = vmul.f32 %v806, %v909
  %v926 = vmul.f32 %v808, %v910
  %v927 = vmul.f32 %v810, %v911
  %v928 = vmul.f32 %v812, %v912
  %v929 = vmul.f32 %v814, %v913
  %v930 = vmul.f32 %v816, %v914
  %v931 = vmul.f32 %v818, %v915
  %v932 = vmul.f32 %v820, %v916
  %933 = vst [vmem:[%s6] sm:$0xff] %v917
  %934 = vst [vmem:[%s6 + $0x8] sm:$0xff] %v918
  %935 = vst [vmem:[%s6 + $0x10] sm:$0xff] %v919
  %936 = vst [vmem:[%s6 + $0x18] sm:$0xff] %v920
  %937 = vst [vmem:[%s6 + $0x20] sm:$0xff] %v921
  %938 = vst [vmem:[%s6 + $0x28] sm:$0xff] %v922
  %939 = vst [vmem:[%s6 + $0x30] sm:$0xff] %v923
  %940 = vst [vmem:[%s6 + $0x38] sm:$0xff] %v924
  %941 = vst [vmem:[%s6 + $0x40] sm:$0xff] %v925
  %942 = vst [vmem:[%s6 + $0x48] sm:$0xff] %v926
  %943 = vst [vmem:[%s6 + $0x50] sm:$0xff] %v927
  %944 = vst [vmem:[%s6 + $0x58] sm:$0xff] %v928
  %945 = vst [vmem:[%s6 + $0x60] sm:$0xff] %v929
  %946 = vst [vmem:[%s6 + $0x68] sm:$0xff] %v930
  %947 = vst [vmem:[%s6 + $0x70] sm:$0xff] %v931
  %948 = vst [vmem:[%s6 + $0x78] sm:$0xff] %v932
  // Predicated region
  $region26: #{gcn_net_forward.1} parent=0 // pred_check
    _
  $region27: #{gcn_net_forward.1} parent=0 // pred_check_branch
    %950 = sbr.rel (0) target = $region29
  $region28: #{gcn_net_forward.1} parent=0 // pred_region
    _
  $region29: #{gcn_net_forward.1} parent=0 // pred_fallthru
    _
  // Predicated region
  $region30: #{gcn_net_forward.1} parent=0 // pred_check
    _
  $region31: #{gcn_net_forward.1} parent=0 // pred_check_branch
    %952 = sbr.rel (0) target = $region33
  $region32: #{gcn_net_forward.1} parent=0 // pred_region
    _
  $region33: #{gcn_net_forward.1} parent=0 // pred_fallthru
    _

</llo_original>
